<compile_context>
chip_gen: v6e
topology: v6e:2x2x1
jax: 0.10.0
libtpu: 0.0.40
codegen_flags: <defaults>
</compile_context>

<pallas_src>
import functools

import jax
import jax.numpy as jnp
from jax.experimental import pallas as pl
from jax.experimental.pallas import tpu as pltpu


def fta_kernel(z_ref, c_lo_ref, c_hi_ref, o_ref, *, eta: float, k_bins: int):
    # z_ref: (TR, D)   c_lo_ref/c_hi_ref: (1, D*K)   o_ref: (TR, D*K)
    z = z_ref[...].astype(jnp.float32)
    c_lo = c_lo_ref[...]          # tiled bin centres c
    c_hi = c_hi_ref[...]          # tiled c + delta

    d = z.shape[1]
    dk = o_ref.shape[1]

    # One-hot expander e[d, d*K + k] = 1, generated in-kernel (a few vregs of
    # VPU work per step; avoids an extra input stream + wrapper tile/repeat).
    row = jax.lax.broadcasted_iota(jnp.int32, (d, dk), 0)
    col = jax.lax.broadcasted_iota(jnp.int32, (d, dk), 1)
    base = row * k_bins
    e = jnp.logical_and(col >= base, col < base + k_bins).astype(jnp.float32)

    # Lane-dense expansion z_exp[:, d*K + k] = z[:, d] on the otherwise-idle
    # MXU.  HIGHEST precision pins an exact contraction (no bf16 truncation of
    # z), keeping bit-level parity with the f32 reference.
    z_exp = jnp.dot(z, e, precision=jax.lax.Precision.HIGHEST,
                    preferred_element_type=jnp.float32)

    # x = clip(c - z, 0) + clip(z - delta - c, 0); the two terms are mutually
    # exclusive for delta > 0 (bin size), so a fused max is exact.
    x = jnp.maximum(jnp.maximum(c_lo - z_exp, z_exp - c_hi), 0.0)

    # out = 1 - fuzzy_i_plus(x) = (1 - x) if x <= eta else 0.
    o_ref[...] = jnp.where(x <= eta, 1.0 - x, 0.0).astype(o_ref.dtype)


def _round_up(x: int, m: int) -> int:
    return ((x + m - 1) // m) * m


def _choose_row_tile(R: int, D: int, DK: int,
                     in_itemsize: int, out_itemsize: int) -> int:
    """Row tile: multiple of 8 sublanes, sized against a padding-aware VMEM
    estimate (lanes round up to 128 per buffer), chip-aware budget, and capped
    so the parallel grid has >= 2 steps whenever there are enough rows."""
    in_row = _round_up(D, 128) * in_itemsize        # VMEM bytes/row, input tile
    out_row = _round_up(DK, 128) * out_itemsize     # VMEM bytes/row, output tile
    per_row = 2 * (in_row + out_row)                # double-buffered in + out

    try:
        vmem_cap = int(pltpu.get_tpu_info().vmem_capacity_bytes)
    except Exception:
        vmem_cap = 64 << 20                         # assume the tightest (v7x)
    # v5e/v6e (128 MiB physical) get a big tile to amortize per-step overhead;
    # v7x (64 MiB per TC, both cores double-buffering) stays conservative.
    budget = (24 << 20) if vmem_cap >= (100 << 20) else (10 << 20)

    tr = budget // max(per_row, 1)
    tr = max(8, min(16384, (tr // 8) * 8))

    r8 = _round_up(max(R, 1), 8)
    if r8 >= 16:
        # Guarantee >= 2 grid steps so "parallel" shards across both v7x TCs.
        half = max(8, _round_up((r8 + 1) // 2, 8))
        tr = min(tr, half)
    return min(tr, r8)


def fta_forward(z: jax.Array, c: jax.Array, delta: float, eta: float,
                *, row_tile: int | None = None,
                out_dtype=None) -> jax.Array:
    """Apply FTA along the last axis of `z`. Output: (*z.shape[:-1], D*K)."""
    assert float(delta) > 0.0, "FTA bin size delta must be positive"
    *lead, D = z.shape
    K = int(c.shape[0])
    DK = D * K
    out_dt = jnp.dtype(out_dtype) if out_dtype is not None else jnp.dtype(z.dtype)

    z2 = z.reshape(-1, D)
    R = z2.shape[0]

    in_item = max(jnp.dtype(z.dtype).itemsize, 1)
    out_item = max(out_dt.itemsize, 1)

    if row_tile is not None:
        TR = max(8, (int(row_tile) // 8) * 8)
    else:
        TR = _choose_row_tile(R, D, DK, in_item, out_item)

    n_tiles = pl.cdiv(R, TR)
    R_pad = n_tiles * TR
    if R_pad != R:
        z2 = jnp.pad(z2, ((0, R_pad - R), (0, 0)))

    # Pre-folded constants: tiled centres c_lo (1, D*K) and c_hi = c + delta.
    c_lo = jnp.tile(c.astype(jnp.float32), D).reshape(1, DK)
    c_hi = c_lo + jnp.float32(delta)

    # Padding-aware VMEM need: double-buffered in/out tiles + tiny constants.
    vmem_need = TR * 2 * (_round_up(D, 128) * in_item +
                          _round_up(DK, 128) * out_item)
    vmem_need += 2 * 2 * 8 * _round_up(DK, 128) * 4
    vmem_limit = int(min(vmem_need + (4 << 20), 128 << 20))

    cost = pl.CostEstimate(
        flops=int(R_pad) * DK * (2 * D + 6),
        transcendentals=0,
        bytes_accessed=int(R_pad * D * in_item + R_pad * DK * out_item
                           + 2 * DK * 4),
    )

    out = pl.pallas_call(
        functools.partial(fta_kernel, eta=float(eta), k_bins=K),
        out_shape=jax.ShapeDtypeStruct((R_pad, DK), out_dt),
        grid=(n_tiles,),
        in_specs=[
            pl.BlockSpec((TR, D), lambda i: (i, 0)),
            pl.BlockSpec((1, DK), lambda i: (0, 0)),
            pl.BlockSpec((1, DK), lambda i: (0, 0)),
        ],
        out_specs=pl.BlockSpec((TR, DK), lambda i: (i, 0)),
        compiler_params=pltpu.CompilerParams(
            dimension_semantics=("parallel",),
            vmem_limit_bytes=vmem_limit),
        cost_estimate=cost,
    )(z2, c_lo, c_hi)

    if R_pad != R:
        out = out[:R]
    return out.reshape(*lead, DK)


def fta_reference(z: jax.Array, c: jax.Array, delta: float, eta: float) -> jax.Array:
    """Pure-JAX reference mirroring the PyTorch forward exactly (f32)."""
    zb = z.astype(jnp.float32)[..., None]
    cf = c.astype(jnp.float32)
    x = jnp.maximum(cf - zb, 0.0) + jnp.maximum(zb - delta - cf, 0.0)
    fuzzy = jnp.where(x <= eta, x, 1.0)
    out = 1.0 - fuzzy
    return out.reshape(*z.shape[:-1], -1)


if __name__ == "__main__":
    # Module parameters (deterministic, in-script): FTA(-1, +1, 0.25, 0.01)
    lower_limit, upper_limit, delta, eta = -1.0, 1.0, 0.25, 0.01
    c = jnp.arange(lower_limit, upper_limit, delta, dtype=jnp.float32)  # K = 8 bins

    key = jax.random.PRNGKey(0)

    # 1) Small example, exact-semantics path: (2, 4, 16) -> (2, 4, 128).
    z = jax.random.normal(key, (2, 4, 16), dtype=jnp.float32) * 1.5
    out = jax.block_until_ready(fta_forward(z, c, delta, eta))
    ref = fta_reference(z, c, delta, eta)
    assert out.shape == ref.shape, (out.shape, ref.shape)
    assert jnp.allclose(out, ref, atol=1e-6, rtol=1e-6), float(
        jnp.max(jnp.abs(out - ref)))

    # 2) Non-multiple row count + explicit small row tile: exercises padding
    #    and a multi-step parallel grid.
    z2 = jax.random.normal(jax.random.PRNGKey(1), (3, 100, 16),
                           dtype=jnp.float32) * 1.5
    out2 = jax.block_until_ready(fta_forward(z2, c, delta, eta, row_tile=64))
    ref2 = fta_reference(z2, c, delta, eta)
    assert out2.shape == ref2.shape, (out2.shape, ref2.shape)
    assert jnp.allclose(out2, ref2, atol=1e-6, rtol=1e-6), float(
        jnp.max(jnp.abs(out2 - ref2)))

    # 3) bf16 output path (the big HBM-store win); auto tile -> >=2 grid steps.
    z3 = jax.random.normal(jax.random.PRNGKey(2), (2, 64, 16),
                           dtype=jnp.float32) * 1.5
    out3 = jax.block_until_ready(
        fta_forward(z3, c, delta, eta, out_dtype=jnp.bfloat16))
    ref3 = fta_reference(z3, c, delta, eta)
    assert out3.shape == ref3.shape and out3.dtype == jnp.bfloat16
    assert jnp.allclose(out3.astype(jnp.float32), ref3, atol=4e-3, rtol=0.0), \
        float(jnp.max(jnp.abs(out3.astype(jnp.float32) - ref3)))

    print("KERNEL_OK")
</pallas_src>

<mosaic_0001>
module attributes {stable_mosaic.version = 11 : i64} {
  func.func @fta_kernel(%arg0: i32, %arg1: memref<8x16xf32, #tpu.memory_space<vmem>>, %arg2: memref<1x128xf32, #tpu.memory_space<vmem>>, %arg3: memref<1x128xf32, #tpu.memory_space<vmem>>, %arg4: memref<8x128xf32, #tpu.memory_space<vmem>>) attributes {dimension_semantics = [#tpu.dimension_semantics<parallel>], iteration_bounds = array<i64: 1>, scalar_prefetch = 0 : i64, scratch_operands = 0 : i64, tpu.core_type = #tpu.core_type<tc>, window_params = [{transform_indices = @transform_0, window_bounds = array<i64: 8, 16>}, {pipeline_mode = #tpu.pipeline_mode<synchronous>, transform_indices = @transform_1, window_bounds = array<i64: 1, 128>}, {pipeline_mode = #tpu.pipeline_mode<synchronous>, transform_indices = @transform_2, window_bounds = array<i64: 1, 128>}, {transform_indices = @transform_3, window_bounds = array<i64: 8, 128>}]} {
    %c0 = arith.constant 0 : index
    %c0_0 = arith.constant 0 : index
    %0 = vector.load %arg1[%c0, %c0_0] : memref<8x16xf32, #tpu.memory_space<vmem>>, vector<8x16xf32>
    %c0_1 = arith.constant 0 : index
    %c0_2 = arith.constant 0 : index
    %1 = vector.load %arg2[%c0_1, %c0_2] : memref<1x128xf32, #tpu.memory_space<vmem>>, vector<1x128xf32>
    %c0_3 = arith.constant 0 : index
    %c0_4 = arith.constant 0 : index
    %2 = vector.load %arg3[%c0_3, %c0_4] : memref<1x128xf32, #tpu.memory_space<vmem>>, vector<1x128xf32>
    %3 = tpu.iota {dimensions = array<i32: 0>} : vector<16x128xi32>
    %4 = tpu.iota {dimensions = array<i32: 1>} : vector<16x128xi32>
    %c8_i32 = arith.constant 8 : i32
    %5 = vector.broadcast %c8_i32 : i32 to vector<16x128xi32>
    %6 = arith.muli %3, %5 : vector<16x128xi32>
    %7 = arith.cmpi sge, %4, %6 : vector<16x128xi32>
    %c8_i32_5 = arith.constant 8 : i32
    %8 = vector.broadcast %c8_i32_5 : i32 to vector<16x128xi32>
    %9 = arith.addi %6, %8 : vector<16x128xi32>
    %10 = arith.cmpi slt, %4, %9 : vector<16x128xi32>
    %11 = arith.andi %7, %10 : vector<16x128xi1>
    %12 = arith.extui %11 : vector<16x128xi1> to vector<16x128xi32>
    %13 = arith.sitofp %12 : vector<16x128xi32> to vector<16x128xf32>
    %cst = arith.constant dense<0.000000e+00> : vector<8x128xf32>
    %14 = tpu.matmul %0, %13, %cst {dimension_numbers = #tpu.dot_dimension_numbers<[1], [0], [0], [1], [0, 0, 1, 1], [], []>, precision = #tpu.contract_precision<fp32>} : vector<8x16xf32>, vector<16x128xf32>, vector<8x128xf32> -> vector<8x128xf32>
    %15 = vector.broadcast %1 : vector<1x128xf32> to vector<8x128xf32>
    %16 = arith.subf %15, %14 : vector<8x128xf32>
    %17 = vector.broadcast %2 : vector<1x128xf32> to vector<8x128xf32>
    %18 = arith.subf %14, %17 : vector<8x128xf32>
    %19 = arith.maximumf %16, %18 : vector<8x128xf32>
    %cst_6 = arith.constant 0.000000e+00 : f32
    %20 = vector.broadcast %cst_6 : f32 to vector<8x128xf32>
    %21 = arith.maximumf %19, %20 : vector<8x128xf32>
    %cst_7 = arith.constant 0.00999999977 : f32
    %22 = vector.broadcast %cst_7 : f32 to vector<8x128xf32>
    %23 = arith.cmpf ole, %21, %22 : vector<8x128xf32>
    %cst_8 = arith.constant 1.000000e+00 : f32
    %24 = vector.broadcast %cst_8 : f32 to vector<8x128xf32>
    %25 = arith.subf %24, %21 : vector<8x128xf32>
    %cst_9 = arith.constant 0.000000e+00 : f32
    %26 = vector.broadcast %cst_9 : f32 to vector<8x128xf32>
    %27 = arith.select %23, %25, %26 : vector<8x128xi1>, vector<8x128xf32>
    %c0_10 = arith.constant 0 : index
    %c0_11 = arith.constant 0 : index
    %28 = vector.load %arg4[%c0_10, %c0_11] : memref<8x128xf32, #tpu.memory_space<vmem>>, vector<8x128xf32>
    tpu.vector_store %arg4[%c0_10, %c0_11], %27 {strides = array<i32>} : memref<8x128xf32, #tpu.memory_space<vmem>>, vector<8x128xf32>,
    return
  }
  func.func @transform_0(%arg0: i32) -> (i32, i32) {
    %c0_i32 = arith.constant 0 : i32
    %c0_i32_0 = arith.constant 0 : i32
    return %arg0, %c0_i32 : i32, i32
  }
  func.func @transform_1(%arg0: i32) -> (i32, i32) {
    %c0_i32 = arith.constant 0 : i32
    %c0_i32_0 = arith.constant 0 : i32
    %c0_i32_1 = arith.constant 0 : i32
    return %c0_i32, %c0_i32_0 : i32, i32
  }
  func.func @transform_2(%arg0: i32) -> (i32, i32) {
    %c0_i32 = arith.constant 0 : i32
    %c0_i32_0 = arith.constant 0 : i32
    %c0_i32_1 = arith.constant 0 : i32
    return %c0_i32, %c0_i32_0 : i32, i32
  }
  func.func @transform_3(%arg0: i32) -> (i32, i32) {
    %c0_i32 = arith.constant 0 : i32
    %c0_i32_0 = arith.constant 0 : i32
    return %arg0, %c0_i32 : i32, i32
  }
}

</mosaic_0001>

<llo_original>
// kernel: tpu_custom_call.1
$region0: #{tpu_custom_call.1}
  #allocation0 [shape = 'u32[]', space=smem, size = 0x4, offset = 0x4, fixed_abs, tag = 'smem constant byte address 0x4 - core index']
  #allocation1 [shape = 'u32[144,128]{1,0:T(1,128)}', space=vmem, size = 0x12000, scoped, tag = 'internal scratch']
  %s0 = inlined_call_operand.hbm [shape: f32[8,16], index: 0, kind: input, shape index: {}]
  %s1 = inlined_call_operand.vmem [shape: f32[1,128], index: 1, kind: input, shape index: {}]
  %s2 = inlined_call_operand.vmem [shape: f32[1,128], index: 2, kind: input, shape index: {}]
  %s3 = inlined_call_operand.hbm [shape: f32[8,128], index: 3, kind: output, shape index: {}]
  %s4 = sld [smem:[#allocation0]]
  $region26: #{tpu_custom_call.1} parent=0
    _
  %s6 = ssub.s32 1, %s4
  %s7 = scalar_select 0, %s6, %s4
  $region1: #{tpu_custom_call.1} parent=0
    #allocation2 [shape = 'u8[4096]{0}', space=vmem, size = 0x1000, scoped, tag = 'input window, operand 0, single buffered']
    #allocation3 [shape = 's32[1]{0}', space=sflag, size = 0x4, scoped, tag = 'scoped memory for tpu_custom_call.1']
    #allocation4 [shape = 's32[1]{0}', space=sflag, size = 0x4, scoped, tag = 'scoped memory for tpu_custom_call.1']
    #allocation5 [shape = 'u8[4096]{0}', space=vmem, size = 0x1000, scoped, tag = 'output window, operand 0, single buffered']
    %8 = vsyncpa [#allocation3], 0
    %9 = vsyncpa [#allocation4], 0
    // Predicated region
    $region2: #{tpu_custom_call.1} parent=1 // pred_check
      _
    $region3: #{tpu_custom_call.1} parent=1 // pred_check_branch
      %11 = sbr.rel (0) target = $region5
    $region4: #{tpu_custom_call.1} parent=1 // pred_region
      %s13 = ssub.s32 128, 128
      %14 = vsyncadd [#allocation3], %s13
      %s16 = sshll.u32 [#allocation2], 4
      %s17 = int_to_ptr.vmem [resolvable:$true] %s16
      %19 = dma.hbm_to_vmem [thread:$0]  %s0, 128, %s17, [#allocation3]
    $region5: #{tpu_custom_call.1} parent=1 // pred_fallthru
      _
    // Predicated region
    $region6: #{tpu_custom_call.1} parent=1 // pred_check
      _
    $region7: #{tpu_custom_call.1} parent=1 // pred_check_branch
      %21 = sbr.rel (0) target = $region9
    $region8: #{tpu_custom_call.1} parent=1 // pred_region
      _
    $region9: #{tpu_custom_call.1} parent=1 // pred_fallthru
      _
    // Predicated region
    $region10: #{tpu_custom_call.1} parent=1 // pred_check
      _
    $region11: #{tpu_custom_call.1} parent=1 // pred_check_branch
      %23 = sbr.rel (0) target = $region13
    $region12: #{tpu_custom_call.1} parent=1 // pred_region
      _
    $region13: #{tpu_custom_call.1} parent=1 // pred_fallthru
      _
    // Predicated region
    $region14: #{tpu_custom_call.1} parent=1 // pred_check
      _
    $region15: #{tpu_custom_call.1} parent=1 // pred_check_branch
      %25 = sbr.rel (0) target = $region17
    $region16: #{tpu_custom_call.1} parent=1 // pred_region
      %26 = dma.done [#allocation3], 128
    $region17: #{tpu_custom_call.1} parent=1 // pred_fallthru
      _
    %v27 = vld [vmem:[#allocation2] sm:$0xff]
    %v28 = vld [vmem:[%s1] sm:$0x1]
    %v29 = vld [vmem:[%s2] sm:$0x1]
    %v30 = vlaneseq
    %v31 = vshrl.u32 %v30, 7
    %v32 = vadd.s32 %v31, 8
    %v33 = vlaneseq
    %v34 = vand.u32 %v33, 127
    %v35 = vmul.u32 %v31, 8
    %v36 = vmul.u32 %v32, 8
    %vm37 = vcmp.ge.s32.totalorder %v34, %v35
    %vm38 = vcmp.ge.s32.totalorder %v34, %v36
    %v39 = vadd.s32 %v35, 8
    %v40 = vadd.s32 %v36, 8
    %vm41 = vcmp.lt.s32.totalorder %v34, %v39
    %vm42 = vcmp.lt.s32.totalorder %v34, %v40
    %vm43 = vmand %vm37, %vm41
    %vm44 = vmand %vm38, %vm42
    %v45 = vsel %vm43, 1, 0
    %v46 = vsel %vm44, 1, 0
    %v47 = vcvt.s32.f32 %v45
    %v48 = vcvt.s32.f32 %v46
    %vm49 = vcmask 130048
    %v51 = vsel %vm49, %v27, 0
    %53 = vmatprep.subr.mxu0 0.0
    %54 = vmatpush1.msra.mxu0 0.0
    %55 = vmatprep.subr.mxu0 0.0
    %56 = vmatpush1.msra.mxu0 0.0
    %57 = vmatprep.subr.mxu0 0.0
    %58 = vmatpush1.msra.mxu0 0.0
    %59 = vmatprep.subr.mxu0 0.0
    %60 = vmatpush1.msra.mxu0 0.0
    %61 = vmatprep.subr.mxu0 0.0
    %62 = vmatpush1.msra.mxu0 0.0
    %63 = vmatprep.subr.mxu0 0.0
    %64 = vmatpush1.msra.mxu0 0.0
    %65 = vmatprep.subr.mxu0 0.0
    %66 = vmatpush1.msra.mxu0 0.0
    %67 = vmatprep.subr.mxu0 0.0
    %68 = vmatpush1.msra.mxu0 0.0
    %69 = vmatprep.subr.mxu0 0.0
    %70 = vmatpush1.msra.mxu0 0.0
    %71 = vmatprep.subr.mxu0 0.0
    %72 = vmatpush1.msra.mxu0 0.0
    %73 = vmatprep.subr.mxu0 0.0
    %74 = vmatpush1.msra.mxu0 0.0
    %75 = vmatprep.subr.mxu0 0.0
    %76 = vmatpush1.msra.mxu0 0.0
    %77 = vmatprep.subr.mxu0 0.0
    %78 = vmatpush1.msra.mxu0 0.0
    %79 = vmatprep.subr.mxu0 0.0
    %80 = vmatpush1.msra.mxu0 0.0
    %81 = vmatprep.subr.mxu0 0.0
    %v82 = vand.u32 %v48, 4294901760
    %83 = vmatpush1.msra.mxu0 %v82
    %84 = vmatprep.subr.mxu0 0.0
    %v85 = vand.u32 %v47, 4294901760
    %86 = vmatpush1.msra.mxu0 %v85
    %87 = vmatprep.subr.mxu0 0.0
    %88 = vmatpush2.msra.mxu0 0.0
    %89 = vmatprep.subr.mxu0 0.0
    %90 = vmatpush2.msra.mxu0 0.0
    %91 = vmatprep.subr.mxu0 0.0
    %92 = vmatpush2.msra.mxu0 0.0
    %93 = vmatprep.subr.mxu0 0.0
    %94 = vmatpush2.msra.mxu0 0.0
    %95 = vmatprep.subr.mxu0 0.0
    %96 = vmatpush2.msra.mxu0 0.0
    %97 = vmatprep.subr.mxu0 0.0
    %98 = vmatpush2.msra.mxu0 0.0
    %99 = vmatprep.subr.mxu0 0.0
    %100 = vmatpush2.msra.mxu0 0.0
    %101 = vmatprep.subr.mxu0 0.0
    %102 = vmatpush2.msra.mxu0 0.0
    %103 = vmatprep.subr.mxu0 0.0
    %104 = vmatpush2.msra.mxu0 0.0
    %105 = vmatprep.subr.mxu0 0.0
    %106 = vmatpush2.msra.mxu0 0.0
    %107 = vmatprep.subr.mxu0 0.0
    %108 = vmatpush2.msra.mxu0 0.0
    %109 = vmatprep.subr.mxu0 0.0
    %110 = vmatpush2.msra.mxu0 0.0
    %111 = vmatprep.subr.mxu0 0.0
    %112 = vmatpush2.msra.mxu0 0.0
    %113 = vmatprep.subr.mxu0 0.0
    %114 = vmatpush2.msra.mxu0 0.0
    %115 = vmatprep.subr.mxu0 0.0
    %116 = vmatpush2.msra.mxu0 0.0
    %117 = vmatprep.subr.mxu0 0.0
    %118 = vmatpush2.msra.mxu0 0.0
    %119 = vmatprep.mubr.f32.mxu0 0.0
    %v120 = vand.u32 %v51, 4294901760
    %v121 = vsub.f32 %v51, %v120
    %v122 = vand.u32 %v121, 4294901760
    %v123 = vsub.f32 %v121, %v122
    %v124 = vand.u32 %v123, 4294901760
    %125 = vmatmul.mubr.f32.gmra.mxu0 %v124
    %v126 = vpop.f32.mrf.mxu0
    %v127 = vadd.f32 0.0, %v126
    %v128 = vpop.f32.mrf.mxu0
    %129 = vdwg.mxu0
    %130 = vmatprep.subr.mxu0 0.0
    %131 = vmatpush1.msra.mxu0 0.0
    %132 = vmatprep.subr.mxu0 0.0
    %133 = vmatpush1.msra.mxu0 0.0
    %134 = vmatprep.subr.mxu0 0.0
    %135 = vmatpush1.msra.mxu0 0.0
    %136 = vmatprep.subr.mxu0 0.0
    %137 = vmatpush1.msra.mxu0 0.0
    %138 = vmatprep.subr.mxu0 0.0
    %139 = vmatpush1.msra.mxu0 0.0
    %140 = vmatprep.subr.mxu0 0.0
    %141 = vmatpush1.msra.mxu0 0.0
    %142 = vmatprep.subr.mxu0 0.0
    %143 = vmatpush1.msra.mxu0 0.0
    %144 = vmatprep.subr.mxu0 0.0
    %145 = vmatpush1.msra.mxu0 0.0
    %146 = vmatprep.subr.mxu0 0.0
    %147 = vmatpush1.msra.mxu0 0.0
    %148 = vmatprep.subr.mxu0 0.0
    %149 = vmatpush1.msra.mxu0 0.0
    %150 = vmatprep.subr.mxu0 0.0
    %151 = vmatpush1.msra.mxu0 0.0
    %152 = vmatprep.subr.mxu0 0.0
    %153 = vmatpush1.msra.mxu0 0.0
    %154 = vmatprep.subr.mxu0 0.0
    %155 = vmatpush1.msra.mxu0 0.0
    %156 = vmatprep.subr.mxu0 0.0
    %157 = vmatpush1.msra.mxu0 0.0
    %158 = vmatprep.subr.mxu0 0.0
    %v159 = vand.u32 %v48, 4294901760
    %v160 = vsub.f32 %v48, %v159
    %v161 = vand.u32 %v160, 4294901760
    %v162 = vsub.f32 %v160, %v161
    %v163 = vand.u32 %v162, 4294901760
    %164 = vmatpush1.msra.mxu0 %v163
    %165 = vmatprep.subr.mxu0 0.0
    %v166 = vand.u32 %v47, 4294901760
    %v167 = vsub.f32 %v47, %v166
    %v168 = vand.u32 %v167, 4294901760
    %v169 = vsub.f32 %v167, %v168
    %v170 = vand.u32 %v169, 4294901760
    %171 = vmatpush1.msra.mxu0 %v170
    %172 = vmatprep.subr.mxu0 0.0
    %173 = vmatpush2.msra.mxu0 0.0
    %174 = vmatprep.subr.mxu0 0.0
    %175 = vmatpush2.msra.mxu0 0.0
    %176 = vmatprep.subr.mxu0 0.0
    %177 = vmatpush2.msra.mxu0 0.0
    %178 = vmatprep.subr.mxu0 0.0
    %179 = vmatpush2.msra.mxu0 0.0
    %180 = vmatprep.subr.mxu0 0.0
    %181 = vmatpush2.msra.mxu0 0.0
    %182 = vmatprep.subr.mxu0 0.0
    %183 = vmatpush2.msra.mxu0 0.0
    %184 = vmatprep.subr.mxu0 0.0
    %185 = vmatpush2.msra.mxu0 0.0
    %186 = vmatprep.subr.mxu0 0.0
    %187 = vmatpush2.msra.mxu0 0.0
    %188 = vmatprep.subr.mxu0 0.0
    %189 = vmatpush2.msra.mxu0 0.0
    %190 = vmatprep.subr.mxu0 0.0
    %191 = vmatpush2.msra.mxu0 0.0
    %192 = vmatprep.subr.mxu0 0.0
    %193 = vmatpush2.msra.mxu0 0.0
    %194 = vmatprep.subr.mxu0 0.0
    %195 = vmatpush2.msra.mxu0 0.0
    %196 = vmatprep.subr.mxu0 0.0
    %197 = vmatpush2.msra.mxu0 0.0
    %198 = vmatprep.subr.mxu0 0.0
    %199 = vmatpush2.msra.mxu0 0.0
    %200 = vmatprep.subr.mxu0 0.0
    %201 = vmatpush2.msra.mxu0 0.0
    %202 = vmatprep.subr.mxu0 0.0
    %203 = vmatpush2.msra.mxu0 0.0
    %204 = vmatprep.mubr.f32.mxu0 0.0
    %v205 = vand.u32 %v51, 4294901760
    %206 = vmatmul.mubr.f32.gmra.mxu0 %v205
    %v207 = vpop.f32.mrf.mxu0
    %v208 = vadd.f32 %v127, %v207
    %v209 = vpop.f32.mrf.mxu0
    %210 = vdwg.mxu0
    %211 = vmatprep.subr.mxu0 0.0
    %212 = vmatpush1.msra.mxu0 0.0
    %213 = vmatprep.subr.mxu0 0.0
    %214 = vmatpush1.msra.mxu0 0.0
    %215 = vmatprep.subr.mxu0 0.0
    %216 = vmatpush1.msra.mxu0 0.0
    %217 = vmatprep.subr.mxu0 0.0
    %218 = vmatpush1.msra.mxu0 0.0
    %219 = vmatprep.subr.mxu0 0.0
    %220 = vmatpush1.msra.mxu0 0.0
    %221 = vmatprep.subr.mxu0 0.0
    %222 = vmatpush1.msra.mxu0 0.0
    %223 = vmatprep.subr.mxu0 0.0
    %224 = vmatpush1.msra.mxu0 0.0
    %225 = vmatprep.subr.mxu0 0.0
    %226 = vmatpush1.msra.mxu0 0.0
    %227 = vmatprep.subr.mxu0 0.0
    %228 = vmatpush1.msra.mxu0 0.0
    %229 = vmatprep.subr.mxu0 0.0
    %230 = vmatpush1.msra.mxu0 0.0
    %231 = vmatprep.subr.mxu0 0.0
    %232 = vmatpush1.msra.mxu0 0.0
    %233 = vmatprep.subr.mxu0 0.0
    %234 = vmatpush1.msra.mxu0 0.0
    %235 = vmatprep.subr.mxu0 0.0
    %236 = vmatpush1.msra.mxu0 0.0
    %237 = vmatprep.subr.mxu0 0.0
    %238 = vmatpush1.msra.mxu0 0.0
    %239 = vmatprep.subr.mxu0 0.0
    %v240 = vand.u32 %v48, 4294901760
    %v241 = vsub.f32 %v48, %v240
    %242 = vmatpush1.msra.mxu0 %v241
    %243 = vmatprep.subr.mxu0 0.0
    %v244 = vand.u32 %v47, 4294901760
    %v245 = vsub.f32 %v47, %v244
    %246 = vmatpush1.msra.mxu0 %v245
    %247 = vmatprep.subr.mxu0 0.0
    %248 = vmatpush2.msra.mxu0 0.0
    %249 = vmatprep.subr.mxu0 0.0
    %250 = vmatpush2.msra.mxu0 0.0
    %251 = vmatprep.subr.mxu0 0.0
    %252 = vmatpush2.msra.mxu0 0.0
    %253 = vmatprep.subr.mxu0 0.0
    %254 = vmatpush2.msra.mxu0 0.0
    %255 = vmatprep.subr.mxu0 0.0
    %256 = vmatpush2.msra.mxu0 0.0
    %257 = vmatprep.subr.mxu0 0.0
    %258 = vmatpush2.msra.mxu0 0.0
    %259 = vmatprep.subr.mxu0 0.0
    %260 = vmatpush2.msra.mxu0 0.0
    %261 = vmatprep.subr.mxu0 0.0
    %262 = vmatpush2.msra.mxu0 0.0
    %263 = vmatprep.subr.mxu0 0.0
    %264 = vmatpush2.msra.mxu0 0.0
    %265 = vmatprep.subr.mxu0 0.0
    %266 = vmatpush2.msra.mxu0 0.0
    %267 = vmatprep.subr.mxu0 0.0
    %268 = vmatpush2.msra.mxu0 0.0
    %269 = vmatprep.subr.mxu0 0.0
    %270 = vmatpush2.msra.mxu0 0.0
    %271 = vmatprep.subr.mxu0 0.0
    %272 = vmatpush2.msra.mxu0 0.0
    %273 = vmatprep.subr.mxu0 0.0
    %274 = vmatpush2.msra.mxu0 0.0
    %275 = vmatprep.subr.mxu0 0.0
    %276 = vmatpush2.msra.mxu0 0.0
    %277 = vmatprep.subr.mxu0 0.0
    %278 = vmatpush2.msra.mxu0 0.0
    %279 = vmatprep.mubr.f32.mxu0 0.0
    %v280 = vand.u32 %v51, 4294901760
    %v281 = vsub.f32 %v51, %v280
    %282 = vmatmul.mubr.f32.gmra.mxu0 %v281
    %v283 = vpop.f32.mrf.mxu0
    %v284 = vadd.f32 %v208, %v283
    %v285 = vpop.f32.mrf.mxu0
    %286 = vdwg.mxu0
    %287 = vmatprep.subr.mxu0 0.0
    %288 = vmatpush1.msra.mxu0 0.0
    %289 = vmatprep.subr.mxu0 0.0
    %290 = vmatpush1.msra.mxu0 0.0
    %291 = vmatprep.subr.mxu0 0.0
    %292 = vmatpush1.msra.mxu0 0.0
    %293 = vmatprep.subr.mxu0 0.0
    %294 = vmatpush1.msra.mxu0 0.0
    %295 = vmatprep.subr.mxu0 0.0
    %296 = vmatpush1.msra.mxu0 0.0
    %297 = vmatprep.subr.mxu0 0.0
    %298 = vmatpush1.msra.mxu0 0.0
    %299 = vmatprep.subr.mxu0 0.0
    %300 = vmatpush1.msra.mxu0 0.0
    %301 = vmatprep.subr.mxu0 0.0
    %302 = vmatpush1.msra.mxu0 0.0
    %303 = vmatprep.subr.mxu0 0.0
    %304 = vmatpush1.msra.mxu0 0.0
    %305 = vmatprep.subr.mxu0 0.0
    %306 = vmatpush1.msra.mxu0 0.0
    %307 = vmatprep.subr.mxu0 0.0
    %308 = vmatpush1.msra.mxu0 0.0
    %309 = vmatprep.subr.mxu0 0.0
    %310 = vmatpush1.msra.mxu0 0.0
    %311 = vmatprep.subr.mxu0 0.0
    %312 = vmatpush1.msra.mxu0 0.0
    %313 = vmatprep.subr.mxu0 0.0
    %314 = vmatpush1.msra.mxu0 0.0
    %315 = vmatprep.subr.mxu0 0.0
    %v316 = vand.u32 %v48, 4294901760
    %317 = vmatpush1.msra.mxu0 %v316
    %318 = vmatprep.subr.mxu0 0.0
    %v319 = vand.u32 %v47, 4294901760
    %320 = vmatpush1.msra.mxu0 %v319
    %321 = vmatprep.subr.mxu0 0.0
    %322 = vmatpush2.msra.mxu0 0.0
    %323 = vmatprep.subr.mxu0 0.0
    %324 = vmatpush2.msra.mxu0 0.0
    %325 = vmatprep.subr.mxu0 0.0
    %326 = vmatpush2.msra.mxu0 0.0
    %327 = vmatprep.subr.mxu0 0.0
    %328 = vmatpush2.msra.mxu0 0.0
    %329 = vmatprep.subr.mxu0 0.0
    %330 = vmatpush2.msra.mxu0 0.0
    %331 = vmatprep.subr.mxu0 0.0
    %332 = vmatpush2.msra.mxu0 0.0
    %333 = vmatprep.subr.mxu0 0.0
    %334 = vmatpush2.msra.mxu0 0.0
    %335 = vmatprep.subr.mxu0 0.0
    %336 = vmatpush2.msra.mxu0 0.0
    %337 = vmatprep.subr.mxu0 0.0
    %338 = vmatpush2.msra.mxu0 0.0
    %339 = vmatprep.subr.mxu0 0.0
    %340 = vmatpush2.msra.mxu0 0.0
    %341 = vmatprep.subr.mxu0 0.0
    %342 = vmatpush2.msra.mxu0 0.0
    %343 = vmatprep.subr.mxu0 0.0
    %344 = vmatpush2.msra.mxu0 0.0
    %345 = vmatprep.subr.mxu0 0.0
    %346 = vmatpush2.msra.mxu0 0.0
    %347 = vmatprep.subr.mxu0 0.0
    %348 = vmatpush2.msra.mxu0 0.0
    %349 = vmatprep.subr.mxu0 0.0
    %350 = vmatpush2.msra.mxu0 0.0
    %351 = vmatprep.subr.mxu0 0.0
    %352 = vmatpush2.msra.mxu0 0.0
    %353 = vmatprep.mubr.f32.mxu0 0.0
    %v354 = vand.u32 %v51, 4294901760
    %v355 = vsub.f32 %v51, %v354
    %v356 = vand.u32 %v355, 4294901760
    %357 = vmatmul.mubr.f32.gmra.mxu0 %v356
    %v358 = vpop.f32.mrf.mxu0
    %v359 = vadd.f32 %v284, %v358
    %v360 = vpop.f32.mrf.mxu0
    %361 = vdwg.mxu0
    %362 = vmatprep.subr.mxu0 0.0
    %363 = vmatpush1.msra.mxu0 0.0
    %364 = vmatprep.subr.mxu0 0.0
    %365 = vmatpush1.msra.mxu0 0.0
    %366 = vmatprep.subr.mxu0 0.0
    %367 = vmatpush1.msra.mxu0 0.0
    %368 = vmatprep.subr.mxu0 0.0
    %369 = vmatpush1.msra.mxu0 0.0
    %370 = vmatprep.subr.mxu0 0.0
    %371 = vmatpush1.msra.mxu0 0.0
    %372 = vmatprep.subr.mxu0 0.0
    %373 = vmatpush1.msra.mxu0 0.0
    %374 = vmatprep.subr.mxu0 0.0
    %375 = vmatpush1.msra.mxu0 0.0
    %376 = vmatprep.subr.mxu0 0.0
    %377 = vmatpush1.msra.mxu0 0.0
    %378 = vmatprep.subr.mxu0 0.0
    %379 = vmatpush1.msra.mxu0 0.0
    %380 = vmatprep.subr.mxu0 0.0
    %381 = vmatpush1.msra.mxu0 0.0
    %382 = vmatprep.subr.mxu0 0.0
    %383 = vmatpush1.msra.mxu0 0.0
    %384 = vmatprep.subr.mxu0 0.0
    %385 = vmatpush1.msra.mxu0 0.0
    %386 = vmatprep.subr.mxu0 0.0
    %387 = vmatpush1.msra.mxu0 0.0
    %388 = vmatprep.subr.mxu0 0.0
    %389 = vmatpush1.msra.mxu0 0.0
    %390 = vmatprep.subr.mxu0 0.0
    %v391 = vand.u32 %v48, 4294901760
    %v392 = vsub.f32 %v48, %v391
    %v393 = vand.u32 %v392, 4294901760
    %394 = vmatpush1.msra.mxu0 %v393
    %395 = vmatprep.subr.mxu0 0.0
    %v396 = vand.u32 %v47, 4294901760
    %v397 = vsub.f32 %v47, %v396
    %v398 = vand.u32 %v397, 4294901760
    %399 = vmatpush1.msra.mxu0 %v398
    %400 = vmatprep.subr.mxu0 0.0
    %401 = vmatpush2.msra.mxu0 0.0
    %402 = vmatprep.subr.mxu0 0.0
    %403 = vmatpush2.msra.mxu0 0.0
    %404 = vmatprep.subr.mxu0 0.0
    %405 = vmatpush2.msra.mxu0 0.0
    %406 = vmatprep.subr.mxu0 0.0
    %407 = vmatpush2.msra.mxu0 0.0
    %408 = vmatprep.subr.mxu0 0.0
    %409 = vmatpush2.msra.mxu0 0.0
    %410 = vmatprep.subr.mxu0 0.0
    %411 = vmatpush2.msra.mxu0 0.0
    %412 = vmatprep.subr.mxu0 0.0
    %413 = vmatpush2.msra.mxu0 0.0
    %414 = vmatprep.subr.mxu0 0.0
    %415 = vmatpush2.msra.mxu0 0.0
    %416 = vmatprep.subr.mxu0 0.0
    %417 = vmatpush2.msra.mxu0 0.0
    %418 = vmatprep.subr.mxu0 0.0
    %419 = vmatpush2.msra.mxu0 0.0
    %420 = vmatprep.subr.mxu0 0.0
    %421 = vmatpush2.msra.mxu0 0.0
    %422 = vmatprep.subr.mxu0 0.0
    %423 = vmatpush2.msra.mxu0 0.0
    %424 = vmatprep.subr.mxu0 0.0
    %425 = vmatpush2.msra.mxu0 0.0
    %426 = vmatprep.subr.mxu0 0.0
    %427 = vmatpush2.msra.mxu0 0.0
    %428 = vmatprep.subr.mxu0 0.0
    %429 = vmatpush2.msra.mxu0 0.0
    %430 = vmatprep.subr.mxu0 0.0
    %431 = vmatpush2.msra.mxu0 0.0
    %432 = vmatprep.mubr.f32.mxu0 0.0
    %v433 = vand.u32 %v51, 4294901760
    %434 = vmatmul.mubr.f32.gmra.mxu0 %v433
    %v435 = vpop.f32.mrf.mxu0
    %v436 = vadd.f32 %v359, %v435
    %v437 = vpop.f32.mrf.mxu0
    %438 = vdwg.mxu0
    %439 = vmatprep.subr.mxu0 0.0
    %440 = vmatpush1.msra.mxu0 0.0
    %441 = vmatprep.subr.mxu0 0.0
    %442 = vmatpush1.msra.mxu0 0.0
    %443 = vmatprep.subr.mxu0 0.0
    %444 = vmatpush1.msra.mxu0 0.0
    %445 = vmatprep.subr.mxu0 0.0
    %446 = vmatpush1.msra.mxu0 0.0
    %447 = vmatprep.subr.mxu0 0.0
    %448 = vmatpush1.msra.mxu0 0.0
    %449 = vmatprep.subr.mxu0 0.0
    %450 = vmatpush1.msra.mxu0 0.0
    %451 = vmatprep.subr.mxu0 0.0
    %452 = vmatpush1.msra.mxu0 0.0
    %453 = vmatprep.subr.mxu0 0.0
    %454 = vmatpush1.msra.mxu0 0.0
    %455 = vmatprep.subr.mxu0 0.0
    %456 = vmatpush1.msra.mxu0 0.0
    %457 = vmatprep.subr.mxu0 0.0
    %458 = vmatpush1.msra.mxu0 0.0
    %459 = vmatprep.subr.mxu0 0.0
    %460 = vmatpush1.msra.mxu0 0.0
    %461 = vmatprep.subr.mxu0 0.0
    %462 = vmatpush1.msra.mxu0 0.0
    %463 = vmatprep.subr.mxu0 0.0
    %464 = vmatpush1.msra.mxu0 0.0
    %465 = vmatprep.subr.mxu0 0.0
    %466 = vmatpush1.msra.mxu0 0.0
    %467 = vmatprep.subr.mxu0 0.0
    %v468 = vand.u32 %v48, 4294901760
    %469 = vmatpush1.msra.mxu0 %v468
    %470 = vmatprep.subr.mxu0 0.0
    %v471 = vand.u32 %v47, 4294901760
    %472 = vmatpush1.msra.mxu0 %v471
    %473 = vmatprep.subr.mxu0 0.0
    %474 = vmatpush2.msra.mxu0 0.0
    %475 = vmatprep.subr.mxu0 0.0
    %476 = vmatpush2.msra.mxu0 0.0
    %477 = vmatprep.subr.mxu0 0.0
    %478 = vmatpush2.msra.mxu0 0.0
    %479 = vmatprep.subr.mxu0 0.0
    %480 = vmatpush2.msra.mxu0 0.0
    %481 = vmatprep.subr.mxu0 0.0
    %482 = vmatpush2.msra.mxu0 0.0
    %483 = vmatprep.subr.mxu0 0.0
    %484 = vmatpush2.msra.mxu0 0.0
    %485 = vmatprep.subr.mxu0 0.0
    %486 = vmatpush2.msra.mxu0 0.0
    %487 = vmatprep.subr.mxu0 0.0
    %488 = vmatpush2.msra.mxu0 0.0
    %489 = vmatprep.subr.mxu0 0.0
    %490 = vmatpush2.msra.mxu0 0.0
    %491 = vmatprep.subr.mxu0 0.0
    %492 = vmatpush2.msra.mxu0 0.0
    %493 = vmatprep.subr.mxu0 0.0
    %494 = vmatpush2.msra.mxu0 0.0
    %495 = vmatprep.subr.mxu0 0.0
    %496 = vmatpush2.msra.mxu0 0.0
    %497 = vmatprep.subr.mxu0 0.0
    %498 = vmatpush2.msra.mxu0 0.0
    %499 = vmatprep.subr.mxu0 0.0
    %500 = vmatpush2.msra.mxu0 0.0
    %501 = vmatprep.subr.mxu0 0.0
    %502 = vmatpush2.msra.mxu0 0.0
    %503 = vmatprep.subr.mxu0 0.0
    %504 = vmatpush2.msra.mxu0 0.0
    %505 = vmatprep.mubr.f32.mxu0 0.0
    %v506 = vand.u32 %v51, 4294901760
    %507 = vmatmul.mubr.f32.gmra.mxu0 %v506
    %v508 = vpop.f32.mrf.mxu0
    %v509 = vadd.f32 %v436, %v508
    %v510 = vpop.f32.mrf.mxu0
    %511 = vdwg.mxu0
    %v513 = vlaneseq
    %v514 = vshrl.u32 %v513, 7
    %v515 = vsub.s32 0, %v514
    %v516 = vrot.slane %v28, %v515
    %v518 = vsub.f32 %v516, %v509
    %v520 = vlaneseq
    %v521 = vshrl.u32 %v520, 7
    %v522 = vsub.s32 0, %v521
    %v523 = vrot.slane %v29, %v522
    %v525 = vsub.f32 %v509, %v523
    %v526 = vmax.f32 %v518, %v525
    %v527 = vmax.f32 %v526, 0.0
    %vm528 = vcmp.le.f32.partialorder %v527, 0.01
    %v529 = vsub.f32 1.0, %v527
    %v530 = vsel %vm528, %v529, 0.0
    %531 = vst [vmem:[#allocation5] sm:$0xff] %v530
    // Predicated region
    $region18: #{tpu_custom_call.1} parent=1 // pred_check
      _
    $region19: #{tpu_custom_call.1} parent=1 // pred_check_branch
      %533 = sbr.rel (0) target = $region21
    $region20: #{tpu_custom_call.1} parent=1 // pred_region
      %s535 = ssub.s32 128, 128
      %536 = vsyncadd [#allocation4], %s535
      %s538 = sshll.u32 [#allocation5], 4
      %s539 = int_to_ptr.vmem [resolvable:$true] %s538
      %541 = dma.vmem_to_hbm [thread:$0]  %s539, 128, %s3, [#allocation4]
    $region21: #{tpu_custom_call.1} parent=1 // pred_fallthru
      _
    // Predicated region
    $region22: #{tpu_custom_call.1} parent=1 // pred_check
      _
    $region23: #{tpu_custom_call.1} parent=1 // pred_check_branch
      %543 = sbr.rel (0) target = $region25
    $region24: #{tpu_custom_call.1} parent=1 // pred_region
      %544 = dma.done [#allocation4], 128
    $region25: #{tpu_custom_call.1} parent=1 // pred_fallthru
      _
    %545 = vsyncpa [#allocation3], 1
    %546 = vsyncpa [#allocation4], 1

</llo_original>
